<compile_context>
chip_gen: v7x
topology: tpu7x:2x2x1
jax: 0.10.0
libtpu: 0.0.40
codegen_flags: <defaults>
</compile_context>

<pallas_src>
import math

import jax
import jax.numpy as jnp
from jax.experimental import pallas as pl
from jax.experimental.pallas import tpu as pltpu


_PALLAS_MIN_BYTES = 1 << 20      # below this, plain XLA fusion wins
_MIN_SPLIT_BYTES = 2 << 20       # split a single-block grid above this (v7x: 2 TCs)
_VMEM_LIMIT_CAP = 56 << 20       # stay under v7x's 64 MiB physical VMEM


def build_positional_encoding(max_len: int, embed_new: int) -> jnp.ndarray:
    """Deterministic sinusoidal PE table, matching the PyTorch __init__."""
    position = jnp.arange(0, max_len, dtype=jnp.float32)[:, None]            # (max_len, 1)
    div_term = jnp.exp(
        jnp.arange(0, embed_new, 2, dtype=jnp.float32)
        * (-math.log(10000.0) / embed_new))                                  # (ceil(E/2),)
    angles = position * div_term                                             # (max_len, ceil(E/2))
    pe = jnp.zeros((max_len, embed_new), dtype=jnp.float32)
    pe = pe.at[:, 0::2].set(jnp.sin(angles)[:, : (embed_new + 1) // 2])
    pe = pe.at[:, 1::2].set(jnp.cos(angles)[:, : embed_new // 2])
    return pe[None, :, :]                                                    # (1, max_len, E)


def _pe_add_kernel(x_ref, pe_ref, o_ref):
    # x_ref : (TB, TC) tile of the flattened input
    # pe_ref: (1,  TC) tile of the flattened PE table (broadcast over sublanes)
    x = x_ref[...].astype(o_ref.dtype)
    p = pe_ref[...].astype(o_ref.dtype)
    o_ref[...] = x + p


def _block_budget_bytes() -> int:
    """Per-block VMEM byte budget, generation gated (8 MiB on v7x, else 4 MiB)."""
    try:
        kind = jax.devices()[0].device_kind.lower()
    except Exception:
        kind = ""
    if "v7" in kind or "7x" in kind:
        return 8 << 20
    return 4 << 20


def _sublane_multiple(*dtypes) -> int:
    """Sublane pack multiple: 8 for 32-bit, 16 for 16-bit, 32 for 8-bit dtypes."""
    m = 8
    for dt in dtypes:
        item = max(1, jnp.dtype(dt).itemsize)
        m = max(m, 8 * max(1, 4 // item))
    return m


def _round_up(x: int, m: int) -> int:
    return ((x + m - 1) // m) * m


def _largest_lane_divisor(C: int, limit: int):
    """Largest multiple-of-128 divisor of C that is <= limit (None if none)."""
    best = None
    t = 128
    top = min(C, limit)
    while t <= top:
        if C % t == 0:
            best = t
        t += 128
    return best


def _pick_b_tile(B: int, sub: int) -> int:
    """Batch-axis tile: a multiple of the sublane pack factor if possible."""
    if B % sub != 0:
        return B                          # small / ragged batch -> full-dim block
    for cand in (8 * sub, 4 * sub, 2 * sub, sub):
        if B % cand == 0:
            return cand
    return B


def positional_encoding_forward(vec: jnp.ndarray,
                                pe: jnp.ndarray,
                                dropout_rate: float = 0.1,
                                training: bool = False,
                                use_pallas=None) -> jnp.ndarray:
    """Equivalent of PositionalEncoding.forward(vec) in eval mode."""
    B, S, E = vec.shape
    pe_slice = pe[:, :S, :]                                       # (1, S, E), float32 table
    out_dtype = jnp.promote_types(vec.dtype, pe_slice.dtype)      # match torch promotion

    in_item = jnp.dtype(vec.dtype).itemsize
    pe_item = jnp.dtype(pe_slice.dtype).itemsize
    out_item = jnp.dtype(out_dtype).itemsize
    max_item = max(in_item, out_item)

    total_bytes = B * S * E * (in_item + out_item)
    if use_pallas is None:
        use_pallas = total_bytes >= _PALLAS_MIN_BYTES

    # TODO(synk): training-mode dropout (random mask + 1/(1-p) scale) not applied;
    # this matches nn.Dropout in eval(), the deterministic forward pass.
    del dropout_rate, training

    if not use_pallas:
        return (vec + pe_slice).astype(out_dtype)      # tiny input: let XLA fuse it

    C = S * E
    x2 = vec.reshape(B, C)                             # lane-dense flattening
    pe2 = pe_slice.reshape(1, C)

    # Pad ragged dims up to hardware tile multiples (sliced back off below).
    sub = _sublane_multiple(vec.dtype, out_dtype)
    C_pad = _round_up(C, 128)
    B_pad = _round_up(B, sub) if B > sub else B
    if B_pad != B or C_pad != C:
        x2 = jnp.pad(x2, ((0, B_pad - B), (0, C_pad - C)))
        pe2 = jnp.pad(pe2, ((0, 0), (0, C_pad - C)))

    budget = _block_budget_bytes()
    tb = _pick_b_tile(B_pad, sub)
    cap_elems = max(128, budget // max(1, tb * max_item))
    tc = _largest_lane_divisor(C_pad, cap_elems) or C_pad

    # If the grid collapsed to a single block for a large input, split the lane
    # axis so both v7x TensorCores get work (no effect on single-TC v5e/v6e).
    if B_pad // tb == 1 and C_pad // tc == 1 and total_bytes >= _MIN_SPLIT_BYTES:
        half = _largest_lane_divisor(C_pad, C_pad // 2)
        if half is not None:
            tc = half

    n_b, n_c = B_pad // tb, C_pad // tc

    # Derive the VMEM limit from actual (double-buffered) usage, with headroom.
    vmem_usage = 2 * tb * tc * (in_item + out_item) + 2 * tc * pe_item
    vmem_limit = int(min(max(vmem_usage + (4 << 20), 16 << 20), _VMEM_LIMIT_CAP))

    out2 = pl.pallas_call(
        _pe_add_kernel,
        out_shape=jax.ShapeDtypeStruct((B_pad, C_pad), out_dtype),
        grid=(n_c, n_b),                                   # batch innermost: the PE
        in_specs=[                                         # block (0, j) is reused
            pl.BlockSpec((tb, tc), lambda j, i: (i, j)),   # across consecutive steps.
            pl.BlockSpec((1, tc), lambda j, i: (0, j)),
        ],
        out_specs=pl.BlockSpec((tb, tc), lambda j, i: (i, j)),
        compiler_params=pltpu.CompilerParams(
            dimension_semantics=("parallel", "parallel"),
            vmem_limit_bytes=vmem_limit,
        ),
    )(x2, pe2)

    if B_pad != B or C_pad != C:
        out2 = out2[:B, :C]
    return out2.reshape(B, S, E)


if __name__ == "__main__":
    MAX_LEN = 16
    DROPOUT = 0.1

    key = jax.random.PRNGKey(0)

    # Small shapes consistent with the module's forward: vec is (B, S, E).
    # Force the Pallas path so the kernel is compiled and executed even though
    # the demo data is tiny.
    checks = [
        ((2, 8, 32), jnp.float32),    # C = 256  -> single lane-dense slab
        ((4, 16, 64), jnp.float32),   # C = 1024 -> exercises divisor-based tiling
        ((4, 16, 64), jnp.bfloat16),  # mixed precision -> promotes to f32 like torch
        ((2, 5, 24), jnp.float32),    # C = 120  -> ragged, pad-to-128 path
    ]

    for (B, S, E), dt in checks:
        key, subkey = jax.random.split(key)
        vec = jax.random.normal(subkey, (B, S, E), dtype=jnp.float32).astype(dt)
        pe = build_positional_encoding(MAX_LEN, E)

        out = positional_encoding_forward(
            vec, pe, dropout_rate=DROPOUT, training=False, use_pallas=True
        )
        out = jax.block_until_ready(out)

        ref = vec + pe[:, :S, :]
        assert out.shape == (B, S, E)
        assert out.dtype == ref.dtype
        assert jnp.allclose(out, ref, atol=1e-6, rtol=1e-6)

    print("KERNEL_OK")
</pallas_src>

<mosaic_0001>
module attributes {stable_mosaic.version = 11 : i64} {
  func.func @_pe_add_kernel(%arg0: i32, %arg1: i32, %arg2: memref<2x256xf32, #tpu.memory_space<vmem>>, %arg3: memref<1x256xf32, #tpu.memory_space<vmem>>, %arg4: memref<2x256xf32, #tpu.memory_space<vmem>>) attributes {dimension_semantics = [#tpu.dimension_semantics<parallel>, #tpu.dimension_semantics<parallel>], iteration_bounds = array<i64: 1, 1>, scalar_prefetch = 0 : i64, scratch_operands = 0 : i64, tpu.core_type = #tpu.core_type<tc>, window_params = [{transform_indices = @transform_0, window_bounds = array<i64: 2, 256>}, {transform_indices = @transform_1, window_bounds = array<i64: 1, 256>}, {transform_indices = @transform_2, window_bounds = array<i64: 2, 256>}]} {
    %c0 = arith.constant 0 : index
    %c0_0 = arith.constant 0 : index
    %0 = vector.load %arg2[%c0, %c0_0] : memref<2x256xf32, #tpu.memory_space<vmem>>, vector<2x256xf32>
    %c0_1 = arith.constant 0 : index
    %c0_2 = arith.constant 0 : index
    %1 = vector.load %arg3[%c0_1, %c0_2] : memref<1x256xf32, #tpu.memory_space<vmem>>, vector<1x256xf32>
    %2 = vector.broadcast %1 : vector<1x256xf32> to vector<2x256xf32>
    %3 = arith.addf %0, %2 : vector<2x256xf32>
    %c0_3 = arith.constant 0 : index
    %c0_4 = arith.constant 0 : index
    %4 = vector.load %arg4[%c0_3, %c0_4] : memref<2x256xf32, #tpu.memory_space<vmem>>, vector<2x256xf32>
    tpu.vector_store %arg4[%c0_3, %c0_4], %3 {strides = array<i32>} : memref<2x256xf32, #tpu.memory_space<vmem>>, vector<2x256xf32>,
    return
  }
  func.func @transform_0(%arg0: i32, %arg1: i32) -> (i32, i32) {
    %c0_i32 = arith.constant 0 : i32
    return %arg1, %arg0 : i32, i32
  }
  func.func @transform_1(%arg0: i32, %arg1: i32) -> (i32, i32) {
    %c0_i32 = arith.constant 0 : i32
    %c0_i32_0 = arith.constant 0 : i32
    return %c0_i32, %arg0 : i32, i32
  }
  func.func @transform_2(%arg0: i32, %arg1: i32) -> (i32, i32) {
    %c0_i32 = arith.constant 0 : i32
    return %arg1, %arg0 : i32, i32
  }
}

</mosaic_0001>

<llo_original>
// kernel: tpu_custom_call.1
$region0: #{tpu_custom_call.1}
  #allocation0 [shape = 'u32[]', space=smem, size = 0x4, offset = 0x4, fixed_abs, tag = 'smem constant byte address 0x4 - core index']
  #allocation1 [shape = 'u32[144,128]{1,0:T(1,128)}', space=vmem, size = 0x12000, scoped, tag = 'internal scratch']
  %s0 = inlined_call_operand.hbm [shape: f32[2,256], index: 0, kind: input, shape index: {}]
  %s1 = inlined_call_operand.vmem [shape: f32[1,256], index: 1, kind: input, shape index: {}]
  %s2 = inlined_call_operand.hbm [shape: f32[2,256], index: 2, kind: output, shape index: {}]
  %s3 = sld [smem:[#allocation0]]
  $region22: #{tpu_custom_call.1} parent=0
    _
  %s5 = ssub.s32 1, %s3
  %s6 = scalar_select 0, %s5, %s3
  $region1: #{tpu_custom_call.1} parent=0
    #allocation2 [shape = 'u8[2048]{0}', space=vmem, size = 0x800, scoped, tag = 'input window, operand 0, single buffered']
    #allocation3 [shape = 's32[1]{0}', space=sflag, size = 0x4, scoped, tag = 'scoped memory for tpu_custom_call.1']
    #allocation4 [shape = 's32[1]{0}', space=sflag, size = 0x4, scoped, tag = 'scoped memory for tpu_custom_call.1']
    #allocation5 [shape = 'u8[2048]{0}', space=vmem, size = 0x800, scoped, tag = 'output window, operand 0, single buffered']
    %7 = vsyncpa [#allocation3], 0
    %8 = vsyncpa [#allocation4], 0
    // Predicated region
    $region2: #{tpu_custom_call.1} parent=1 // pred_check
      _
    $region3: #{tpu_custom_call.1} parent=1 // pred_check_branch
      %10 = sbr.rel (0) target = $region5
    $region4: #{tpu_custom_call.1} parent=1 // pred_region
      %s12 = ssub.s32 64, 64
      %13 = vsyncadd [#allocation3], %s12
      %s15 = sshll.u32 [#allocation2], 4
      %s16 = int_to_ptr.vmem [resolvable:$true] %s15
      %18 = dma.hbm_to_vmem [thread:$0]  %s0, 64, %s16, [#allocation3]
    $region5: #{tpu_custom_call.1} parent=1 // pred_fallthru
      _
    // Predicated region
    $region6: #{tpu_custom_call.1} parent=1 // pred_check
      _
    $region7: #{tpu_custom_call.1} parent=1 // pred_check_branch
      %20 = sbr.rel (0) target = $region9
    $region8: #{tpu_custom_call.1} parent=1 // pred_region
      _
    $region9: #{tpu_custom_call.1} parent=1 // pred_fallthru
      _
    // Predicated region
    $region10: #{tpu_custom_call.1} parent=1 // pred_check
      _
    $region11: #{tpu_custom_call.1} parent=1 // pred_check_branch
      %22 = sbr.rel (0) target = $region13
    $region12: #{tpu_custom_call.1} parent=1 // pred_region
      %23 = dma.done [#allocation3], 64
    $region13: #{tpu_custom_call.1} parent=1 // pred_fallthru
      _
    %v24 = vld [vmem:[#allocation2] sm:$0xf]
    %v25 = vld [vmem:[%s1] sm:$0x3]
    %v27 = vlaneseq
    %v28 = vshrl.u32 %v27, 7
    %v29 = vsub.s32 0, %v28
    %v30 = vrot.slane %v25, %v29
    %v31 = vlaneseq
    %v32 = vshrl.u32 %v31, 7
    %v33 = vsub.s32 1, %v32
    %v34 = vrot.slane %v25, %v33
    %v35 = vcombine.low %v30, %v34
    %v37 = vunpack.c.l.s4 1983009808
    %v38 = vunpack.c.0.s8 %v37
    %v39 = vlaneseq
    %v40 = vshrl.u32 %v39, 7
    %v41 = vsub.s32 %v38, %v40
    %v42 = vrot.slane %v35, %v41
    %v44 = vadd.f32 %v24, %v42
    %45 = vst [vmem:[#allocation5] sm:$0xf] %v44
    // Predicated region
    $region14: #{tpu_custom_call.1} parent=1 // pred_check
      _
    $region15: #{tpu_custom_call.1} parent=1 // pred_check_branch
      %47 = sbr.rel (0) target = $region17
    $region16: #{tpu_custom_call.1} parent=1 // pred_region
      %s49 = ssub.s32 64, 64
      %50 = vsyncadd [#allocation4], %s49
      %s52 = sshll.u32 [#allocation5], 4
      %s53 = int_to_ptr.vmem [resolvable:$true] %s52
      %55 = dma.vmem_to_hbm [thread:$0]  %s53, 64, %s2, [#allocation4]
    $region17: #{tpu_custom_call.1} parent=1 // pred_fallthru
      _
    // Predicated region
    $region18: #{tpu_custom_call.1} parent=1 // pred_check
      _
    $region19: #{tpu_custom_call.1} parent=1 // pred_check_branch
      %57 = sbr.rel (0) target = $region21
    $region20: #{tpu_custom_call.1} parent=1 // pred_region
      %58 = dma.done [#allocation4], 64
    $region21: #{tpu_custom_call.1} parent=1 // pred_fallthru
      _
    %59 = vsyncpa [#allocation3], 1
    %60 = vsyncpa [#allocation4], 1

</llo_original>
